<compile_context>
chip_gen: v7x
topology: tpu7x:2x2x1
jax: 0.10.0
libtpu: 0.0.40
codegen_flags: <defaults>
</compile_context>

<pallas_src>
import functools
import math

import jax
import jax.numpy as jnp
from jax import lax
from jax.experimental import pallas as pl
from jax.experimental.pallas import tpu as pltpu

_LANE = 128
_MIN_TILE = 512                       # lanes; below this HBM roofline suffers
_SAFE_VMEM_FALLBACK = 64 * 1024 * 1024  # v7x per-core size; safe everywhere


def _vmem_capacity_bytes():
    try:
        return int(pltpu.get_tpu_info().vmem_capacity_bytes)
    except Exception:
        return _SAFE_VMEM_FALLBACK


def _attention_from_pooled(pooled, gp_ref, C, k, pad):
    """pooled: (C, 1) f32.  gp_ref: SMEM f32[1 + k] = [sum(w1*w2), conv taps].

    Returns sigmoid(conv_k(pooled) * sigmoid(pooled * gate)); the size-k
    channel conv is done with zero-padded sublane shifts (no CxC matrix).
    """
    gate = gp_ref[0]
    y_dyn = pooled * gate                                   # collapsed fc2(fc1(.))

    if pad > 0:
        zpad = jnp.zeros((pad, 1), jnp.float32)
        padded = jnp.concatenate([zpad, pooled, zpad], axis=0)   # (C + 2*pad, 1)
    else:
        padded = pooled

    y_conv = gp_ref[1] * padded[0:C, :]
    for i in range(1, k):
        y_conv = y_conv + gp_ref[1 + i] * padded[i:i + C, :]

    return jax.nn.sigmoid(y_conv * jax.nn.sigmoid(y_dyn))   # (C, 1) f32


def _fused_kernel(gp_ref, x_ref, o_ref, *, C, k, pad, inv_hw):
    """One batch element per grid step: pool + attention + broadcast multiply."""
    x2 = x_ref[...]                                          # (C, HW) full extent
    pooled = jnp.sum(x2.astype(jnp.float32), axis=-1, keepdims=True) * inv_hw
    attn = _attention_from_pooled(pooled, gp_ref, C, k, pad)
    o_ref[...] = (x2 * attn.astype(x2.dtype)).astype(o_ref.dtype)


def _pool_attn_kernel(gp_ref, x_ref, a_ref, *, C, k, pad, HW, thw, inv_hw):
    """Tiled global average pool with masked ragged tail; attention computed
    once per batch in the final step and written to the (C, 1) output."""
    h = pl.program_id(1)

    @pl.when(h == 0)
    def _():
        a_ref[...] = jnp.zeros_like(a_ref)

    x2 = x_ref[...].astype(jnp.float32)                      # (C, thw)
    # Mask columns beyond the true spatial extent (OOB reads are unspecified).
    col = h * thw + lax.broadcasted_iota(jnp.int32, (1, thw), 1)
    x2 = jnp.where(col < HW, x2, 0.0)
    a_ref[...] += jnp.sum(x2, axis=-1, keepdims=True)

    @pl.when(h == pl.num_programs(1) - 1)
    def _():
        pooled = a_ref[...] * inv_hw
        a_ref[...] = _attention_from_pooled(pooled, gp_ref, C, k, pad)


def _mul_kernel(a_ref, x_ref, o_ref):
    """Pure broadcast multiply; OOB columns of the ragged tail are dropped by
    Pallas on writeback."""
    x2 = x_ref[...]
    o_ref[...] = (x2 * a_ref[...].astype(x2.dtype)).astype(o_ref.dtype)


def dynamic_eca(x, w_fc1, w_fc2, w_conv, *,
                vmem_block_budget=None, min_fused_batch=3):
    """x: (B, C, H, W).  w_fc1: (C//16, 1, 1), w_fc2: (1, C//16, 1), w_conv: (1, 1, k)."""
    B, C, H, W = x.shape
    HW = H * W
    k = int(w_conv.shape[-1])
    pad = (k - 1) // 2
    esize = x.dtype.itemsize
    inv_hw = 1.0 / float(HW)

    vmem_cap = _vmem_capacity_bytes()
    if vmem_block_budget is None:
        # ~46 MiB on v7x (64 MiB VMEM), ~92 MiB on v5e/v6e (128 MiB VMEM).
        vmem_block_budget = int(vmem_cap * 0.72)
    vmem_limit_cap = vmem_cap - (2 << 20)        # never request >= physical VMEM

    # fc2(fc1(y)) collapses to y * sum(w_fc1 * w_fc2): one scalar, computed here.
    gate = jnp.sum(w_fc1.reshape(-1).astype(jnp.float32) *
                   w_fc2.reshape(-1).astype(jnp.float32))
    gp = jnp.concatenate([gate.reshape(1),
                          w_conv.reshape(-1).astype(jnp.float32)])   # (1 + k,) f32

    x_flat = x.reshape(B, C, HW)
    smem_spec = pl.BlockSpec(memory_space=pltpu.MemorySpace.SMEM)

    # Fused per-step VMEM: double-buffered input + output blocks, plus the f32
    # pooling copy for narrow dtypes.
    fused_block_bytes = 4 * C * HW * esize + (C * HW * 4 if esize < 4 else 0)
    use_fused = (fused_block_bytes <= vmem_block_budget) and (B >= min_fused_batch)

    if use_fused:
        # ---- fused single-pass path: minimum (2x) HBM traffic ----
        out = pl.pallas_call(
            functools.partial(_fused_kernel, C=C, k=k, pad=pad, inv_hw=inv_hw),
            out_shape=jax.ShapeDtypeStruct((B, C, HW), x.dtype),
            grid=(B,),
            in_specs=[
                smem_spec,
                pl.BlockSpec((pl.Squeezed(), C, HW), lambda b: (b, 0, 0)),
            ],
            out_specs=pl.BlockSpec((pl.Squeezed(), C, HW), lambda b: (b, 0, 0)),
            compiler_params=pltpu.CompilerParams(
                dimension_semantics=("parallel",),
                vmem_limit_bytes=min(fused_block_bytes + (8 << 20), vmem_limit_cap)),
            cost_estimate=pl.CostEstimate(
                flops=2 * B * C * HW,
                transcendentals=2 * B * C,
                bytes_accessed=2 * B * C * HW * esize),
        )(gp, x_flat)
    else:
        # ---- tiled two-pass path (large blocks or small B) ----
        def choose_tile(n_buffers):
            t = (vmem_block_budget // (n_buffers * C * esize)) // _LANE * _LANE
            t = max(t, _MIN_TILE)
            return HW if t >= HW else t          # full extent if it fits

        thw_pool = choose_tile(2)                # pool pass: 2 input buffers
        thw_mul = choose_tile(4)                 # mul pass: 2 in + 2 out buffers
        nh_pool = pl.cdiv(HW, thw_pool)
        nh_mul = pl.cdiv(HW, thw_mul)

        attn = pl.pallas_call(
            functools.partial(_pool_attn_kernel, C=C, k=k, pad=pad,
                              HW=HW, thw=thw_pool, inv_hw=inv_hw),
            out_shape=jax.ShapeDtypeStruct((B, C, 1), jnp.float32),
            grid=(B, nh_pool),
            in_specs=[
                smem_spec,
                pl.BlockSpec((pl.Squeezed(), C, thw_pool), lambda b, h: (b, 0, h)),
            ],
            out_specs=pl.BlockSpec((pl.Squeezed(), C, 1), lambda b, h: (b, 0, 0)),
            compiler_params=pltpu.CompilerParams(
                dimension_semantics=("parallel", "arbitrary"),
                vmem_limit_bytes=min(
                    2 * C * thw_pool * esize + C * thw_pool * 4 + (8 << 20),
                    vmem_limit_cap)),
            cost_estimate=pl.CostEstimate(
                flops=B * C * HW,
                transcendentals=2 * B * C,
                bytes_accessed=B * C * HW * esize + B * C * 4),
        )(gp, x_flat)

        out = pl.pallas_call(
            _mul_kernel,
            out_shape=jax.ShapeDtypeStruct((B, C, HW), x.dtype),
            grid=(B, nh_mul),
            in_specs=[
                pl.BlockSpec((pl.Squeezed(), C, 1), lambda b, h: (b, 0, 0)),
                pl.BlockSpec((pl.Squeezed(), C, thw_mul), lambda b, h: (b, 0, h)),
            ],
            out_specs=pl.BlockSpec((pl.Squeezed(), C, thw_mul), lambda b, h: (b, 0, h)),
            compiler_params=pltpu.CompilerParams(
                dimension_semantics=("parallel", "parallel"),
                vmem_limit_bytes=min(4 * C * thw_mul * esize + (8 << 20),
                                     vmem_limit_cap)),
            cost_estimate=pl.CostEstimate(
                flops=B * C * HW,
                transcendentals=0,
                bytes_accessed=2 * B * C * HW * esize + B * C * 4),
        )(attn, x_flat)

    return out.reshape(B, C, H, W)


def _reference(x, w_fc1, w_fc2, w_conv):
    """Pure-JAX reference mirroring the PyTorch forward."""
    B, C, H, W = x.shape
    k = w_conv.shape[-1]
    pad = (k - 1) // 2
    pooled = jnp.mean(x, axis=(2, 3))                               # (B, C)
    y_dyn = pooled * jnp.sum(w_fc1.reshape(-1) * w_fc2.reshape(-1))  # fc2(fc1(.))
    pooled_p = jnp.pad(pooled, ((0, 0), (pad, pad)))
    wk = w_conv.reshape(k)
    y_conv = sum(wk[i] * pooled_p[:, i:i + C] for i in range(k))
    attn = jax.nn.sigmoid(y_conv * jax.nn.sigmoid(y_dyn))
    return x * attn[:, :, None, None]


if __name__ == "__main__":
    def make_inputs(B, C, H, W, seed=0):
        # channel must be >= 16 so that channel // 16 >= 1 (as the module assumes)
        gamma, b_hp = 2, 1
        t = int(abs((math.log(C, 2) + b_hp) / gamma))
        k = t if t % 2 else t + 1
        C16 = C // 16
        key = jax.random.PRNGKey(seed)
        kx, k1, k2, k3 = jax.random.split(key, 4)
        x = jax.random.normal(kx, (B, C, H, W), dtype=jnp.float32)
        w_fc1 = 0.1 * jax.random.normal(k1, (C16, 1, 1), dtype=jnp.float32)
        w_fc2 = 0.1 * jax.random.normal(k2, (1, C16, 1), dtype=jnp.float32)
        w_conv = 0.1 * jax.random.normal(k3, (1, 1, k), dtype=jnp.float32)
        return x, w_fc1, w_fc2, w_conv

    # Case 1: lane-aligned spatial extent, default path selection
    #         (B=2 < 3 -> tiled two-pass path).
    x, w1, w2, wc = make_inputs(2, 32, 16, 16)
    ref = _reference(x, w1, w2, wc)
    out = jax.block_until_ready(dynamic_eca(x, w1, w2, wc))
    assert out.shape == x.shape and out.dtype == x.dtype
    assert float(jnp.max(jnp.abs(out - ref))) < 1e-5

    # Case 2: same data through the fused single-pass path.
    out_f = jax.block_until_ready(dynamic_eca(x, w1, w2, wc, min_fused_batch=1))
    assert float(jnp.max(jnp.abs(out_f - ref))) < 1e-5

    # Case 3: ragged spatial extent (HW = 23*23 = 529, not a multiple of 128),
    #         fused path with a full-extent block (no host-side pad / slice).
    x3, w1, w2, wc = make_inputs(3, 32, 23, 23, seed=1)
    ref3 = _reference(x3, w1, w2, wc)
    out3 = jax.block_until_ready(dynamic_eca(x3, w1, w2, wc))
    assert float(jnp.max(jnp.abs(out3 - ref3))) < 1e-5

    # Case 4: ragged spatial extent through the tiled path with a tiny budget so
    #         the masked tail tile (512 + 17 lanes) is exercised.
    out4 = jax.block_until_ready(
        dynamic_eca(x3, w1, w2, wc, vmem_block_budget=64 * 1024))
    assert float(jnp.max(jnp.abs(out4 - ref3))) < 1e-5

    print("KERNEL_OK")
</pallas_src>

<mosaic_0001>
module attributes {stable_mosaic.version = 11 : i64} {
  func.func @_pool_attn_kernel(%arg0: i32, %arg1: i32, %arg2: memref<4xf32, #tpu.memory_space<smem>>, %arg3: memref<1x32x256xf32, #tpu.memory_space<vmem>>, %arg4: memref<1x32x1xf32, #tpu.memory_space<vmem>>) attributes {dimension_semantics = [#tpu.dimension_semantics<parallel>, #tpu.dimension_semantics<arbitrary>], iteration_bounds = array<i64: 2, 1>, scalar_prefetch = 0 : i64, scratch_operands = 0 : i64, tpu.core_type = #tpu.core_type<tc>, window_params = [{transform_indices = @transform_0, window_bounds = array<i64: 4>}, {transform_indices = @transform_1, window_bounds = array<i64: 1, 32, 256>}, {transform_indices = @transform_2, window_bounds = array<i64: 1, 32, 1>}]} {
    %c0_i32 = arith.constant 0 : i32
    %0 = arith.cmpi eq, %arg1, %c0_i32 : i32
    %1 = arith.extui %0 : i1 to i32
    %c0_i32_0 = arith.constant 0 : i32
    %2 = arith.cmpi ne, %1, %c0_i32_0 : i32
    scf.if %2 {
      %cst_13 = arith.constant 0.000000e+00 : f32
      %26 = vector.broadcast %cst_13 : f32 to vector<32x1xf32>
      %c0_14 = arith.constant 0 : index
      %c0_15 = arith.constant 0 : index
      %c0_16 = arith.constant 0 : index
      %27 = vector.load %arg4[%c0_14, %c0_15, %c0_16] : memref<1x32x1xf32, #tpu.memory_space<vmem>>, vector<1x32x1xf32>
      %28 = vector.shape_cast %27 : vector<1x32x1xf32> to vector<32x1xf32>
      %29 = vector.shape_cast %26 : vector<32x1xf32> to vector<1x32x1xf32>
      tpu.vector_store %arg4[%c0_14, %c0_15, %c0_16], %29 {strides = array<i32>} : memref<1x32x1xf32, #tpu.memory_space<vmem>>, vector<1x32x1xf32>,
    } else {
    }
    %c0 = arith.constant 0 : index
    %c0_1 = arith.constant 0 : index
    %c0_2 = arith.constant 0 : index
    %3 = vector.load %arg3[%c0, %c0_1, %c0_2] : memref<1x32x256xf32, #tpu.memory_space<vmem>>, vector<1x32x256xf32>
    %4 = vector.shape_cast %3 : vector<1x32x256xf32> to vector<32x256xf32>
    %c256_i32 = arith.constant 256 : i32
    %5 = arith.muli %arg1, %c256_i32 : i32
    %6 = tpu.iota {dimensions = array<i32: 1>} : vector<1x256xi32>
    %7 = vector.broadcast %5 : i32 to vector<1x256xi32>
    %8 = arith.addi %7, %6 : vector<1x256xi32>
    %c256_i32_3 = arith.constant 256 : i32
    %9 = vector.broadcast %c256_i32_3 : i32 to vector<1x256xi32>
    %10 = arith.cmpi slt, %8, %9 : vector<1x256xi32>
    %cst = arith.constant 0.000000e+00 : f32
    %11 = vector.shape_cast %10 : vector<1x256xi1> to vector<1x256xi1>
    %12 = vector.broadcast %11 : vector<1x256xi1> to vector<32x256xi1>
    %13 = vector.broadcast %cst : f32 to vector<32x256xf32>
    %14 = arith.select %12, %4, %13 : vector<32x256xi1>, vector<32x256xf32>
    %c0_4 = arith.constant 0 : index
    %c0_5 = arith.constant 0 : index
    %c0_6 = arith.constant 0 : index
    %15 = vector.load %arg4[%c0_4, %c0_5, %c0_6] : memref<1x32x1xf32, #tpu.memory_space<vmem>>, vector<1x32x1xf32>
    %16 = vector.shape_cast %15 : vector<1x32x1xf32> to vector<32x1xf32>
    %cst_7 = arith.constant dense<0.000000e+00> : vector<32xf32>
    %17 = vector.multi_reduction <add>, %14, %cst_7 [1] : vector<32x256xf32> to vector<32xf32>
    %18 = vector.shape_cast %17 : vector<32xf32> to vector<32x1xf32>
    %19 = arith.addf %16, %18 : vector<32x1xf32>
    %c0_8 = arith.constant 0 : index
    %c0_9 = arith.constant 0 : index
    %c0_10 = arith.constant 0 : index
    %20 = vector.load %arg4[%c0_8, %c0_9, %c0_10] : memref<1x32x1xf32, #tpu.memory_space<vmem>>, vector<1x32x1xf32>
    %21 = vector.shape_cast %20 : vector<1x32x1xf32> to vector<32x1xf32>
    %22 = vector.shape_cast %19 : vector<32x1xf32> to vector<1x32x1xf32>
    tpu.vector_store %arg4[%c0_8, %c0_9, %c0_10], %22 {strides = array<i32>} : memref<1x32x1xf32, #tpu.memory_space<vmem>>, vector<1x32x1xf32>,
    %c0_i32_11 = arith.constant 0 : i32
    %23 = arith.cmpi eq, %arg1, %c0_i32_11 : i32
    %24 = arith.extui %23 : i1 to i32
    %c0_i32_12 = arith.constant 0 : i32
    %25 = arith.cmpi ne, %24, %c0_i32_12 : i32
    scf.if %25 {
      %c0_13 = arith.constant 0 : index
      %c0_14 = arith.constant 0 : index
      %c0_15 = arith.constant 0 : index
      %26 = vector.load %arg4[%c0_13, %c0_14, %c0_15] : memref<1x32x1xf32, #tpu.memory_space<vmem>>, vector<1x32x1xf32>
      %27 = vector.shape_cast %26 : vector<1x32x1xf32> to vector<32x1xf32>
      %cst_16 = arith.constant 3.906250e-03 : f32
      %28 = vector.broadcast %cst_16 : f32 to vector<32x1xf32>
      %29 = arith.mulf %27, %28 : vector<32x1xf32>
      %c0_17 = arith.constant 0 : index
      %30 = memref.load %arg2[%c0_17] : memref<4xf32, #tpu.memory_space<smem>>
      %31 = vector.broadcast %30 : f32 to vector<32x1xf32>
      %32 = arith.mulf %29, %31 : vector<32x1xf32>
      %cst_18 = arith.constant 0.000000e+00 : f32
      %33 = vector.broadcast %cst_18 : f32 to vector<1x1xf32>
      %34 = tpu.concatenate %33, %29, %33 in 0 : vector<1x1xf32>, vector<32x1xf32>, vector<1x1xf32> -> vector<34x1xf32>
      %c1 = arith.constant 1 : index
      %35 = memref.load %arg2[%c1] : memref<4xf32, #tpu.memory_space<smem>>
      %36 = vector.extract_strided_slice %34 {offsets = [0, 0], sizes = [32, 1], strides = [1, 1]} : vector<34x1xf32> to vector<32x1xf32>
      %37 = vector.broadcast %35 : f32 to vector<32x1xf32>
      %38 = arith.mulf %37, %36 : vector<32x1xf32>
      %c2 = arith.constant 2 : index
      %39 = memref.load %arg2[%c2] : memref<4xf32, #tpu.memory_space<smem>>
      %40 = vector.extract_strided_slice %34 {offsets = [1, 0], sizes = [32, 1], strides = [1, 1]} : vector<34x1xf32> to vector<32x1xf32>
      %41 = vector.broadcast %39 : f32 to vector<32x1xf32>
      %42 = arith.mulf %41, %40 : vector<32x1xf32>
      %43 = arith.addf %38, %42 : vector<32x1xf32>
      %c3 = arith.constant 3 : index
      %44 = memref.load %arg2[%c3] : memref<4xf32, #tpu.memory_space<smem>>
      %45 = vector.extract_strided_slice %34 {offsets = [2, 0], sizes = [32, 1], strides = [1, 1]} : vector<34x1xf32> to vector<32x1xf32>
      %46 = vector.broadcast %44 : f32 to vector<32x1xf32>
      %47 = arith.mulf %46, %45 : vector<32x1xf32>
      %48 = arith.addf %43, %47 : vector<32x1xf32>
      %49 = arith.negf %32 : vector<32x1xf32>
      %50 = math.exp %49 : vector<32x1xf32>
      %cst_19 = arith.constant 1.000000e+00 : f32
      %51 = vector.broadcast %cst_19 : f32 to vector<32x1xf32>
      %52 = arith.addf %51, %50 : vector<32x1xf32>
      %53 = arith.divf %51, %52 : vector<32x1xf32>
      %54 = arith.mulf %48, %53 : vector<32x1xf32>
      %55 = arith.negf %54 : vector<32x1xf32>
      %56 = math.exp %55 : vector<32x1xf32>
      %cst_20 = arith.constant 1.000000e+00 : f32
      %57 = vector.broadcast %cst_20 : f32 to vector<32x1xf32>
      %58 = arith.addf %57, %56 : vector<32x1xf32>
      %59 = arith.divf %57, %58 : vector<32x1xf32>
      %c0_21 = arith.constant 0 : index
      %c0_22 = arith.constant 0 : index
      %c0_23 = arith.constant 0 : index
      %60 = vector.load %arg4[%c0_21, %c0_22, %c0_23] : memref<1x32x1xf32, #tpu.memory_space<vmem>>, vector<1x32x1xf32>
      %61 = vector.shape_cast %60 : vector<1x32x1xf32> to vector<32x1xf32>
      %62 = vector.shape_cast %59 : vector<32x1xf32> to vector<1x32x1xf32>
      tpu.vector_store %arg4[%c0_21, %c0_22, %c0_23], %62 {strides = array<i32>} : memref<1x32x1xf32, #tpu.memory_space<vmem>>, vector<1x32x1xf32>,
    } else {
    }
    return
  }
  func.func @transform_0(%arg0: i32, %arg1: i32) -> i32 {
    %c0_i32 = arith.constant 0 : i32
    %c0_i32_0 = arith.constant 0 : i32
    return %c0_i32 : i32
  }
  func.func @transform_1(%arg0: i32, %arg1: i32) -> (i32, i32, i32) {
    %c0_i32 = arith.constant 0 : i32
    %c0_i32_0 = arith.constant 0 : i32
    return %arg0, %c0_i32, %arg1 : i32, i32, i32
  }
  func.func @transform_2(%arg0: i32, %arg1: i32) -> (i32, i32, i32) {
    %c0_i32 = arith.constant 0 : i32
    %c0_i32_0 = arith.constant 0 : i32
    %c0_i32_1 = arith.constant 0 : i32
    return %arg0, %c0_i32, %c0_i32_0 : i32, i32, i32
  }
}

</mosaic_0001>

<llo_original>
// kernel: tpu_custom_call.1
$region0: #{tpu_custom_call.1}
  #allocation0 [shape = 'u32[]', space=smem, size = 0x4, offset = 0x4, fixed_abs, tag = 'smem constant byte address 0x4 - core index']
  #allocation1 [shape = 'u32[144,128]{1,0:T(1,128)}', space=vmem, size = 0x12000, scoped, tag = 'internal scratch']
  %s0 = inlined_call_operand.hbm [shape: f32[4], index: 0, kind: input, shape index: {}]
  %s1 = inlined_call_operand.hbm [shape: f32[2,32,256], index: 1, kind: input, shape index: {}]
  %s2 = inlined_call_operand.vmem [shape: f32[2,32,1], index: 2, kind: output, shape index: {}]
  %s3 = sld [smem:[#allocation0]]
  $region57: #{tpu_custom_call.1} parent=0
    _
  %s5 = ssub.s32 1, %s3
  %s6 = scalar_select 0, %s5, %s3
  $region1: #{tpu_custom_call.1} parent=0
    #allocation2 [shape = 'u8[512]{0}', space=smem, size = 0x200, scoped, tag = 'input window, operand 0, single buffered']
    #allocation3 [shape = 's32[2]{0}', space=sflag, size = 0x8, scoped, tag = 'scoped memory for tpu_custom_call.1']
    #allocation4 [shape = 's32[2]{0}', space=sflag, size = 0x8, scoped, tag = 'scoped memory for tpu_custom_call.1']
    #allocation5 [shape = 'u8[65536]{0}', space=vmem, size = 0x10000, scoped, tag = 'input window, operand 1']
    %7 = vsyncpa [#allocation4], 0
    %8 = vsyncpa [#allocation3], 0
    %s9 = scalar_lea.sflag [#allocation3], 1
    %10 = vsyncpa %s9, 0
    loop: start=0, step=1, limit=4
    $region2: #{tpu_custom_call.1} parent=1 // loop_pre_header
      _
    $region3: #{tpu_custom_call.1} parent=1 // loop_header
      %s12 = sphi 0, %s16
      %p13 = scmp.ge.s32.totalorder %s12, 4
      %s19 = sphi 0, %s31
      %s20 = sphi 0, %s27
      %s21 = sphi 0, %s19
      %s22 = sphi 0, %s20
      %s23 = sphi 0, %s21
      %s24 = sphi 0, %s22
      %s32 = sphi 0, %s32
      %s34 = sphi 0, %s32
      %s35 = sphi 0, %s34
      %s49 = sphi 0, %s35
      %s57 = sphi 0, %s59
      %s60 = sphi 0, %s57
      %s61 = sphi 0, %s60
      %s77 = sphi 0, %s61
      %s83 = sphi 0, %s85
      %s86 = sphi 0, %s83
      %s87 = sphi 0, %s86
      %s103 = sphi 0, %s87
    $region4: #{tpu_custom_call.1} parent=1 // loop_header_branch
      %15 = sbr.rel (%p13) target = $region8
    $region5: #{tpu_custom_call.1} parent=1 // loop_body
      %s17 = ssub.s32 %s12, 1
      %s18 = ssub.s32 %s12, 2
      %s25 = sadd.s32 1, %s20
      %p26 = scmp.ge.s32.totalorder %s25, 1
      %s27 = scalar_select %p26, 0, %s25
      %s28 = sadd.s32 1, %s19
      %s29 = scalar_select %p26, %s28, %s19
      %p30 = scmp.ge.s32.totalorder %s29, 2
      %s31 = scalar_select %p30, 0, %s29
      %s33 = sadd.s32 %s32, 1
      %p36 = scmp.eq.s32.totalorder %s12, 1
      %p37 = scmp.ne.s32.totalorder %s32, %s34
      %p38 = scmp.eq.s32.totalorder %s12, 0
      %p39 = por %p37, %p38
      %p40 = scmp.ne.s32.totalorder %s32, %s34
      %p41 = scmp.eq.s32.totalorder %s17, 1
      %p42 = por %p40, %p41
      %p43 = scmp.ne.s32.totalorder %s34, %s35
      %p44 = scmp.eq.s32.totalorder %s17, 0
      %p45 = por %p43, %p44
      %p46 = scmp.ne.s32.totalorder %s34, %s35
      %p47 = scmp.eq.s32.totalorder %s18, 1
      %p48 = por %p46, %p47
      %p50 = scmp.ne.s32.totalorder %s35, %s49
      %p51 = scmp.eq.s32.totalorder %s18, 0
      %p52 = por %p50, %p51
      %s53 = ssub.s32 %s19, %s31
      %s54 = ssub.s32 %s20, %s27
      %s55 = sor.u32 %s53, %s54
      %p56 = scmp.eq.s32.totalorder %s55, 0
      %s58 = sadd.s32 %s57, 1
      %s59 = scalar_select %p56, %s57, %s58
      %p62 = pneg %p56
      %p63 = scmp.eq.s32.totalorder %s12, 1
      %p64 = por %p62, %p63
      %p65 = scmp.ne.s32.totalorder %s57, %s60
      %p66 = scmp.eq.s32.totalorder %s12, 0
      %p67 = por %p65, %p66
      %p68 = scmp.ne.s32.totalorder %s57, %s60
      %p69 = scmp.eq.s32.totalorder %s17, 1
      %p70 = por %p68, %p69
      %p71 = scmp.ne.s32.totalorder %s60, %s61
      %p72 = scmp.eq.s32.totalorder %s17, 0
      %p73 = por %p71, %p72
      %p74 = scmp.ne.s32.totalorder %s60, %s61
      %p75 = scmp.eq.s32.totalorder %s18, 1
      %p76 = por %p74, %p75
      %p78 = scmp.ne.s32.totalorder %s61, %s77
      %p79 = scmp.eq.s32.totalorder %s18, 0
      %p80 = por %p78, %p79
      %s81 = ssub.s32 %s19, %s31
      %p82 = scmp.eq.s32.totalorder %s81, 0
      %s84 = sadd.s32 %s83, 1
      %s85 = scalar_select %p82, %s83, %s84
      %p88 = pneg %p82
      %p89 = scmp.eq.s32.totalorder %s12, 1
      %p90 = por %p88, %p89
      %p91 = scmp.ne.s32.totalorder %s83, %s86
      %p92 = scmp.eq.s32.totalorder %s12, 0
      %p93 = por %p91, %p92
      %p94 = scmp.ne.s32.totalorder %s83, %s86
      %p95 = scmp.eq.s32.totalorder %s17, 1
      %p96 = por %p94, %p95
      %p97 = scmp.ne.s32.totalorder %s86, %s87
      %p98 = scmp.eq.s32.totalorder %s17, 0
      %p99 = por %p97, %p98
      %p100 = scmp.ne.s32.totalorder %s86, %s87
      %p101 = scmp.eq.s32.totalorder %s18, 1
      %p102 = por %p100, %p101
      %p104 = scmp.ne.s32.totalorder %s87, %s103
      %p105 = scmp.eq.s32.totalorder %s18, 0
      %p106 = por %p104, %p105
      %p107 = scmp.le.s32.totalorder 1, %s12
      %p108 = scmp.lt.s32.totalorder %s12, 3
      %p109 = pnand %p107, %p108
      %p110 = pneg %p109
      // Predicated region
      $region9: #{tpu_custom_call.1} parent=5 // pred_check
        _
      $region10: #{tpu_custom_call.1} parent=5 // pred_check_branch
        %112 = sbr.rel (%p109) target = $region12
      $region11: #{tpu_custom_call.1} parent=5 // pred_region
        %s113 = ssub.s32 %s12, 1
        // Predicated region
        $region13: #{tpu_custom_call.1} parent=11 // pred_check
          %p114 = pneg %p45
        $region14: #{tpu_custom_call.1} parent=11 // pred_check_branch
          %116 = sbr.rel (%p114) target = $region16
        $region15: #{tpu_custom_call.1} parent=11 // pred_region
          %s118 = ssub.s32 16, 16
          %119 = vsyncadd [#allocation4], %s118
          %122 = dma.hbm_to_smem %s0, 16, [#allocation2], [#allocation4]
        $region16: #{tpu_custom_call.1} parent=11 // pred_fallthru
          _
      $region12: #{tpu_custom_call.1} parent=5 // pred_fallthru
        _
      %p123 = scmp.lt.s32.totalorder %s12, 2
      // Predicated region
      $region17: #{tpu_custom_call.1} parent=5 // pred_check
        %p124 = pneg %p123
      $region18: #{tpu_custom_call.1} parent=5 // pred_check_branch
        %126 = sbr.rel (%p124) target = $region20
      $region19: #{tpu_custom_call.1} parent=5 // pred_region
        // Predicated region
        $region21: #{tpu_custom_call.1} parent=19 // pred_check
          %p127 = pneg %p67
        $region22: #{tpu_custom_call.1} parent=19 // pred_check_branch
          %129 = sbr.rel (%p127) target = $region24
        $region23: #{tpu_custom_call.1} parent=19 // pred_region
          %s130 = sand.u32 %s57, 1
          %s131 = scalar_lea.sflag [#allocation3], %s130
          %s132 = sand.u32 %s57, 1
          %s133 = smul.addr %s132, 64
          %s134 = scalar_lea.vmem [#allocation5], %s133
          %s135 = smul.u32 2, %s20
          %s137 = ssub.s32 1024, 1024
          %138 = vsyncadd %s131, %s137
          %s139 = smul.addr %s19, 8
          %s140 = sadd.s32 %s135, %s139
          %s141 = smul.addr %s140, 128
          %s142 = scalar_lea.hbm %s1, %s141
          %s143 = sshll.u32 %s134, 4
          %s144 = int_to_ptr.vmem [resolvable:$true] %s143
          %149 = dma.hbm_to_vmem [thread:$0]  %s142, 1024, %s144, %s131, 256, 256, 16
        $region24: #{tpu_custom_call.1} parent=19 // pred_fallthru
          _
      $region20: #{tpu_custom_call.1} parent=5 // pred_fallthru
        _
      %p150 = scmp.le.s32.totalorder 1, %s12
      %p151 = scmp.lt.s32.totalorder %s12, 3
      %p152 = pnand %p150, %p151
      %p153 = pneg %p152
      // Predicated region
      $region25: #{tpu_custom_call.1} parent=5 // pred_check
        _
      $region26: #{tpu_custom_call.1} parent=5 // pred_check_branch
        %155 = sbr.rel (%p152) target = $region28
      $region27: #{tpu_custom_call.1} parent=5 // pred_region
        %s156 = ssub.s32 %s12, 1
        // Predicated region
        $region29: #{tpu_custom_call.1} parent=27 // pred_check
          %p157 = pneg %p45
        $region30: #{tpu_custom_call.1} parent=27 // pred_check_branch
          %159 = sbr.rel (%p157) target = $region32
        $region31: #{tpu_custom_call.1} parent=27 // pred_region
          %160 = dma.done [#allocation4], 16
        $region32: #{tpu_custom_call.1} parent=27 // pred_fallthru
          _
        %s161 = sand.u32 %s60, 1
        %s162 = scalar_lea.sflag [#allocation3], %s161
        %s163 = sand.u32 %s60, 1
        %s164 = smul.addr %s163, 64
        %s165 = scalar_lea.vmem [#allocation5], %s164
        // Predicated region
        $region33: #{tpu_custom_call.1} parent=27 // pred_check
          %p166 = pneg %p73
        $region34: #{tpu_custom_call.1} parent=27 // pred_check_branch
          %168 = sbr.rel (%p166) target = $region36
        $region35: #{tpu_custom_call.1} parent=27 // pred_region
          %169 = dma.done %s162, 1024
        $region36: #{tpu_custom_call.1} parent=27 // pred_fallthru
          _
        %170 = sfence
        %p171 = pneg %p45
        %p172 = pneg %p42
        %s173 = sand.u32 %s60, 1
        %s174 = scalar_lea.sflag [#allocation3], %s173
        %s175 = sand.u32 %s60, 1
        %s176 = smul.addr %s175, 64
        %s177 = scalar_lea.vmem [#allocation5], %s176
        %p178 = pneg %p73
        %p179 = pneg %p70
        %p180 = pneg %p99
        %p181 = pneg %p96
        %p182 = scmp.lt.s32.totalorder %s21, 1
        %s183 = scalar_select %p182, %s21, 1
        %s184 = smul.addr %s183, 4
        %s185 = smul.addr %s184, 8
        %s186 = scalar_lea.vmem %s2, %s185
        %s187 = smul.u32 2, %s22
        %p188 = scmp.lt.s32.totalorder %s21, 1
        %s189 = scalar_select %p188, %s21, 1
        %s190 = smul.addr %s189, 4
        %s191 = smul.addr %s190, 8
        %s192 = scalar_lea.vmem %s2, %s191
        %p193 = scmp.eq.s32.totalorder %s22, 0
        // Predicated region
        $region37: #{tpu_custom_call.1} parent=27 // pred_check
          %p194 = pneg %p193
        $region38: #{tpu_custom_call.1} parent=27 // pred_check_branch
          %196 = sbr.rel (%p194) target = $region40
        $region39: #{tpu_custom_call.1} parent=27 // pred_region
          %vm197 = vcmask 7168
          %198 = vst.msk [vmem:[%s192] sm:$0xff] %vm197, 0.0
          %199 = vst.msk [vmem:[%s192 + $0x8] sm:$0xff] %vm197, 0.0
          %200 = vst.msk [vmem:[%s192 + $0x10] sm:$0xff] %vm197, 0.0
          %201 = vst.msk [vmem:[%s192 + $0x18] sm:$0xff] %vm197, 0.0
        $region40: #{tpu_custom_call.1} parent=27 // pred_fallthru
          _
        %v202 = vld [vmem:[%s165] sm:$0xff]
        %v203 = vld [vmem:[%s165 + $0x8] sm:$0xff]
        %v204 = vld [vmem:[%s165 + $0x10] sm:$0xff]
        %v205 = vld [vmem:[%s165 + $0x18] sm:$0xff]
        %v206 = vld [vmem:[%s165 + $0x20] sm:$0xff]
        %v207 = vld [vmem:[%s165 + $0x28] sm:$0xff]
        %v208 = vld [vmem:[%s165 + $0x30] sm:$0xff]
        %v209 = vld [vmem:[%s165 + $0x38] sm:$0xff]
        %s210 = smul.u32 %s22, 256
        %v211 = vlaneseq
        %v212 = vand.u32 %v211, 127
        %v213 = vadd.s32 %v212, 128
        %v214 = vstv %s210
        %v215 = vadd.s32 %v214, %v212
        %v216 = vadd.s32 %v214, %v213
        %vm217 = vcmp.lt.s32.totalorder %v215, 256
        %vm218 = vcmp.lt.s32.totalorder %v216, 256
        %v219 = vsel %vm217, 1, 0
        %v220 = vsel %vm218, 1, 0
        %vm221 = vcmp.eq.s32.totalorder %v219, 1
        %vm222 = vcmp.eq.s32.totalorder %v220, 1
        %v223 = vsel %vm221, %v202, 0.0
        %v224 = vsel %vm222, %v203, 0.0
        %v225 = vsel %vm221, %v204, 0.0
        %v226 = vsel %vm222, %v205, 0.0
        %v227 = vsel %vm221, %v206, 0.0
        %v228 = vsel %vm222, %v207, 0.0
        %v229 = vsel %vm221, %v208, 0.0
        %v230 = vsel %vm222, %v209, 0.0
        %v231 = vld [vmem:[%s192] sm:$0xff]
        %v232 = vld [vmem:[%s192 + $0x8] sm:$0xff]
        %v233 = vld [vmem:[%s192 + $0x10] sm:$0xff]
        %v234 = vld [vmem:[%s192 + $0x18] sm:$0xff]
        %v235 = vadd.f32 %v223, %v224
        %236 = vadd.xlane.f32.xlu0 %v235
        %v237 = vpop.xlane.xlu0 %236
        %v238 = vadd.f32 %v225, %v226
        %239 = vadd.xlane.f32.xlu0 %v238
        %v240 = vpop.xlane.xlu0 %239
        %v241 = vadd.f32 %v227, %v228
        %242 = vadd.xlane.f32.xlu0 %v241
        %v243 = vpop.xlane.xlu0 %242
        %v244 = vadd.f32 %v229, %v230
        %245 = vadd.xlane.f32.xlu0 %v244
        %v246 = vpop.xlane.xlu0 %245
        %v247 = vadd.f32 %v231, %v237
        %v248 = vadd.f32 %v232, %v240
        %v249 = vadd.f32 %v233, %v243
        %v250 = vadd.f32 %v234, %v246
        %vm251 = vcmask 7168
        %252 = vst.msk [vmem:[%s192] sm:$0xff] %vm251, %v247
        %253 = vst.msk [vmem:[%s192 + $0x8] sm:$0xff] %vm251, %v248
        %254 = vst.msk [vmem:[%s192 + $0x10] sm:$0xff] %vm251, %v249
        %255 = vst.msk [vmem:[%s192 + $0x18] sm:$0xff] %vm251, %v250
        // Predicated region
        $region41: #{tpu_custom_call.1} parent=27 // pred_check
          %p256 = pneg %p193
        $region42: #{tpu_custom_call.1} parent=27 // pred_check_branch
          %258 = sbr.rel (%p256) target = $region44
        $region43: #{tpu_custom_call.1} parent=27 // pred_region
          %v259 = vld [vmem:[%s192] sm:$0xff]
          %v260 = vld [vmem:[%s192 + $0x8] sm:$0xff]
          %v261 = vld [vmem:[%s192 + $0x10] sm:$0xff]
          %v262 = vld [vmem:[%s192 + $0x18] sm:$0xff]
          %v263 = vmul.f32 %v259, 0.00390625
          %v264 = vmul.f32 %v260, 0.00390625
          %v265 = vmul.f32 %v261, 0.00390625
          %v266 = vmul.f32 %v262, 0.00390625
          %s267 = sld [smem:[#allocation2]]
          %v268 = vstv %s267
          %v269 = vmul.f32 %v263, %v268
          %v270 = vmul.f32 %v264, %v268
          %v271 = vmul.f32 %v265, %v268
          %v272 = vmul.f32 %v266, %v268
          %vm277 = vcmask 1040384
          %v278 = vrot.slane %v263, 7
          %v279 = vrot.slane %v264, 7
          %v280 = vsel %vm277, %v278, %v279
          %v281 = vrot.slane %v265, 7
          %v282 = vsel %vm277, %v279, %v281
          %v283 = vrot.slane %v266, 7
          %v284 = vsel %vm277, %v281, %v283
          %v290 = vsel %vm277, 0.0, %v278
          %v291 = vsel %vm277, %v283, 0.0
          %s292 = sld [smem:[#allocation2 + $0x1]]
          %v293 = vstv %s292
          %v294 = vmul.f32 %v293, %v290
          %v295 = vmul.f32 %v293, %v280
          %v296 = vmul.f32 %v293, %v282
          %v297 = vmul.f32 %v293, %v284
          %s298 = sld [smem:[#allocation2 + $0x2]]
          %v299 = vstv %s298
          %v300 = vmul.f32 %v299, %v290
          %v301 = vmul.f32 %v299, %v280
          %v302 = vmul.f32 %v299, %v282
          %v303 = vmul.f32 %v299, %v284
          %v304 = vmul.f32 %v299, %v291
          %vm310 = vcmask 1046528
          %v311 = vrot.slane %v300, 1
          %v312 = vrot.slane %v301, 1
          %v313 = vsel %vm310, %v311, %v312
          %v314 = vrot.slane %v302, 1
          %v315 = vsel %vm310, %v312, %v314
          %v316 = vrot.slane %v303, 1
          %v317 = vsel %vm310, %v314, %v316
          %v318 = vrot.slane %v304, 1
          %v319 = vsel %vm310, %v316, %v318
          %v324 = vadd.f32 %v294, %v313
          %v325 = vadd.f32 %v295, %v315
          %v326 = vadd.f32 %v296, %v317
          %v327 = vadd.f32 %v297, %v319
          %s328 = sld [smem:[#allocation2 + $0x3]]
          %v329 = vstv %s328
          %v330 = vmul.f32 %v329, %v290
          %v331 = vmul.f32 %v329, %v280
          %v332 = vmul.f32 %v329, %v282
          %v333 = vmul.f32 %v329, %v284
          %v334 = vmul.f32 %v329, %v291
          %vm340 = vcmask 1045504
          %v341 = vrot.slane %v330, 2
          %v342 = vrot.slane %v331, 2
          %v343 = vsel %vm340, %v341, %v342
          %v344 = vrot.slane %v332, 2
          %v345 = vsel %vm340, %v342, %v344
          %v346 = vrot.slane %v333, 2
          %v347 = vsel %vm340, %v344, %v346
          %v348 = vrot.slane %v334, 2
          %v349 = vsel %vm340, %v346, %v348
          %v354 = vadd.f32 %v324, %v343
          %v355 = vadd.f32 %v325, %v345
          %v356 = vadd.f32 %v326, %v347
          %v357 = vadd.f32 %v327, %v349
          %v358 = vxor.u32 %v269, 2147483648
          %v359 = vxor.u32 %v270, 2147483648
          %v360 = vxor.u32 %v271, 2147483648
          %v361 = vxor.u32 %v272, 2147483648
          %v362 = vmul.f32 %v358, 1.442695
          %v363 = vpow.pop %v362
          %v364 = vmul.f32 %v359, 1.442695
          %v365 = vpow.pop %v364
          %v366 = vmul.f32 %v360, 1.442695
          %v367 = vpow.pop %v366
          %v368 = vmul.f32 %v361, 1.442695
          %v369 = vpow.pop %v368
          %v370 = vadd.f32 %v363, 1.0
          %v371 = vadd.f32 %v365, 1.0
          %v372 = vadd.f32 %v367, 1.0
          %v373 = vadd.f32 %v369, 1.0
          %v374 = vrcp.pop %v370
          %v375 = vmul.f32 1.0, %v374
          %v376 = vrcp.pop %v371
          %v377 = vmul.f32 1.0, %v376
          %v378 = vrcp.pop %v372
          %v379 = vmul.f32 1.0, %v378
          %v380 = vrcp.pop %v373
          %v381 = vmul.f32 1.0, %v380
          %v382 = vmul.f32 %v354, %v375
          %v383 = vmul.f32 %v355, %v377
          %v384 = vmul.f32 %v356, %v379
          %v385 = vmul.f32 %v357, %v381
          %v386 = vxor.u32 %v382, 2147483648
          %v387 = vxor.u32 %v383, 2147483648
          %v388 = vxor.u32 %v384, 2147483648
          %v389 = vxor.u32 %v385, 2147483648
          %v390 = vmul.f32 %v386, 1.442695
          %v391 = vpow.pop %v390
          %v392 = vmul.f32 %v387, 1.442695
          %v393 = vpow.pop %v392
          %v394 = vmul.f32 %v388, 1.442695
          %v395 = vpow.pop %v394
          %v396 = vmul.f32 %v389, 1.442695
          %v397 = vpow.pop %v396
          %v398 = vadd.f32 %v391, 1.0
          %v399 = vadd.f32 %v393, 1.0
          %v400 = vadd.f32 %v395, 1.0
          %v401 = vadd.f32 %v397, 1.0
          %v402 = vrcp.pop %v398
          %v403 = vmul.f32 1.0, %v402
          %v404 = vrcp.pop %v399
          %v405 = vmul.f32 1.0, %v404
          %v406 = vrcp.pop %v400
          %v407 = vmul.f32 1.0, %v406
          %v408 = vrcp.pop %v401
          %v409 = vmul.f32 1.0, %v408
          %410 = vst.msk [vmem:[%s192] sm:$0xff] %vm251, %v403
          %411 = vst.msk [vmem:[%s192 + $0x8] sm:$0xff] %vm251, %v405
          %412 = vst.msk [vmem:[%s192 + $0x10] sm:$0xff] %vm251, %v407
          %413 = vst.msk [vmem:[%s192 + $0x18] sm:$0xff] %vm251, %v409
        $region44: #{tpu_custom_call.1} parent=27 // pred_fallthru
          _
        %p414 = scmp.lt.s32.totalorder %s21, 1
        %s415 = scalar_select %p414, %s21, 1
        %s416 = smul.addr %s415, 4
        %s417 = smul.addr %s416, 8
        %s418 = scalar_lea.vmem %s2, %s417
        // Predicated region
        $region45: #{tpu_custom_call.1} parent=27 // pred_check
          %p419 = pneg %p96
        $region46: #{tpu_custom_call.1} parent=27 // pred_check_branch
          %421 = sbr.rel (%p419) target = $region48
        $region47: #{tpu_custom_call.1} parent=27 // pred_region
          _
        $region48: #{tpu_custom_call.1} parent=27 // pred_fallthru
          _
      $region28: #{tpu_custom_call.1} parent=5 // pred_fallthru
        _
      %p422 = scmp.le.s32.totalorder 2, %s12
      // Predicated region
      $region49: #{tpu_custom_call.1} parent=5 // pred_check
        %p423 = pneg %p422
      $region50: #{tpu_custom_call.1} parent=5 // pred_check_branch
        %425 = sbr.rel (%p423) target = $region52
      $region51: #{tpu_custom_call.1} parent=5 // pred_region
        %s426 = ssub.s32 %s12, 2
        // Predicated region
        $region53: #{tpu_custom_call.1} parent=51 // pred_check
          %p427 = pneg %p102
        $region54: #{tpu_custom_call.1} parent=51 // pred_check_branch
          %429 = sbr.rel (%p427) target = $region56
        $region55: #{tpu_custom_call.1} parent=51 // pred_region
          %p430 = scmp.lt.s32.totalorder %s23, 1
          %s431 = scalar_select %p430, %s23, 1
          %s432 = smul.addr %s431, 4
          %s433 = smul.addr %s432, 8
          %s434 = scalar_lea.vmem %s2, %s433
        $region56: #{tpu_custom_call.1} parent=51 // pred_fallthru
          _
      $region52: #{tpu_custom_call.1} parent=5 // pred_fallthru
        _
    $region6: #{tpu_custom_call.1} parent=1 // loop_footer
      %s16 = sadd.s32 1, %s12
    $region7: #{tpu_custom_call.1} parent=1 // loop_footer_branch
      %11 = sbr.rel target = $region3
    $region8: #{tpu_custom_call.1} parent=1 // loop_exit
      _
    %435 = vsyncpa [#allocation3], 1
    %s436 = scalar_lea.sflag [#allocation3], 1
    %437 = vsyncpa %s436, 1
    %438 = vsyncpa [#allocation4], 1
    %s439 = scalar_lea.sflag [#allocation4], 1
    %440 = vsyncpa %s439, 1

</llo_original>
